<compile_context>
chip_gen: v7x
topology: tpu7x:2x2x1
jax: 0.10.0
libtpu: 0.0.40
codegen_flags: <defaults>
</compile_context>

<pallas_src>
import jax
import jax.numpy as jnp
import numpy as np
from jax.experimental import pallas as pl
from jax.experimental.pallas import tpu as pltpu


def _round_up(x, m):
    return ((x + m - 1) // m) * m


def _sublane_pack(dtype) -> int:
    """Rows per packed sublane tile for dtype: 8 (f32), 16 (bf16), 32 (int8/fp8)."""
    itemsize = jnp.dtype(dtype).itemsize
    return 8 * max(1, 4 // itemsize)


def _derive_vmem_limit(needed_bytes: int) -> int:
    """Footprint + margin, floored at 16 MiB, never the whole 64 MiB of a v7x TC."""
    return int(min(max(needed_bytes + needed_bytes // 2 + (8 << 20), 16 << 20),
                   48 << 20))


# ---------------------------------------------------------------------------
# Path 1: small table -> one-hot MXU matmul, table resident in VMEM.
# ---------------------------------------------------------------------------
def _onehot_kernel(pid_ref, w_ref, out_ref):
    # pid_ref: (T, 1) int32   w_ref: (P, H_pad)   out_ref: (T, H_pad)
    T = out_ref.shape[0]
    P = w_ref.shape[0]
    pid = pid_ref[...]                                               # (T, 1)
    one_hot = (pid == jax.lax.broadcasted_iota(jnp.int32, (T, P), 1)
               ).astype(w_ref.dtype)                                 # (T, P)
    out_ref[...] = jnp.dot(one_hot, w_ref[...],
                           preferred_element_type=jnp.float32
                           ).astype(out_ref.dtype)


def _onehot_lookup(pid_flat, w_pad, *, tokens_per_block):
    N = pid_flat.shape[0]
    P, H_pad = w_pad.shape
    pack = _sublane_pack(w_pad.dtype)
    wsize = jnp.dtype(w_pad.dtype).itemsize

    def _footprint(t):
        return (P * H_pad * wsize          # table (single-buffered, resident)
                + 2 * t * H_pad * wsize    # output double buffer
                + 2 * t * 128 * 4          # (t, 1) int32 id blocks (lane-padded)
                + t * P * max(wsize, 4))   # (t, P) one-hot intermediate

    # Token tile: rounded to the dtype sublane pack; shrink if working set is big.
    T = _round_up(min(tokens_per_block, N), pack)
    while T > pack and _footprint(T) > (36 << 20):
        T = max(pack, _round_up(T // 2, pack))

    N_pad = _round_up(N, T)
    if N_pad != N:
        pid_flat = jnp.pad(pid_flat, (0, N_pad - N))   # pad with valid id 0
    pid2 = pid_flat.reshape(N_pad, 1)

    def _run(single_buffer_table):
        if single_buffer_table:
            # Invariant table: constant index_map keeps it resident; single-buffer it.
            w_spec = pl.BlockSpec((P, H_pad), lambda t: (0, 0),
                                  pipeline_mode=pl.Buffered(1))
        else:
            w_spec = pl.BlockSpec((P, H_pad), lambda t: (0, 0))
        return pl.pallas_call(
            _onehot_kernel,
            out_shape=jax.ShapeDtypeStruct((N_pad, H_pad), w_pad.dtype),
            grid_spec=pltpu.PrefetchScalarGridSpec(
                num_scalar_prefetch=0,
                grid=(N_pad // T,),
                in_specs=[pl.BlockSpec((T, 1), lambda t: (t, 0)), w_spec],
                out_specs=pl.BlockSpec((T, H_pad), lambda t: (t, 0)),
            ),
            compiler_params=pltpu.CompilerParams(
                dimension_semantics=("parallel",),
                vmem_limit_bytes=_derive_vmem_limit(_footprint(T)),
            ),
        )(pid2, w_pad)

    try:
        out = _run(single_buffer_table=True)
    except Exception:
        # Per-spec pipeline_mode / Buffered(1) unsupported in this JAX build:
        # fall back to a double-buffered (still VMEM-resident) table.
        out = _run(single_buffer_table=False)
    return out[:N]


# ---------------------------------------------------------------------------
# Path 2: large table -> HBM row gather driven by scalar-prefetched indices.
# ---------------------------------------------------------------------------
def _gather_kernel(pid_smem_ref, *refs):
    # pid_smem_ref only drives the index_maps; rows arrive already gathered.
    del pid_smem_ref
    out_ref = refs[-1]
    for g, row_ref in enumerate(refs[:-1]):
        out_ref[pl.ds(g, 1), :] = row_ref[0]          # (1, H_pad) row copy


def _gather_lookup(pid_flat, w_pad, *, rows_per_step):
    N = pid_flat.shape[0]
    P, H_pad = w_pad.shape
    pack = _sublane_pack(w_pad.dtype)
    wsize = jnp.dtype(w_pad.dtype).itemsize

    G = _round_up(max(rows_per_step, pack), pack)      # tokens per grid step
    N_pad = _round_up(N, G)
    if N_pad != N:
        pid_flat = jnp.pad(pid_flat, (0, N_pad - N))   # pad with valid id 0

    # Row dim leads; the (1, H_pad) trailing dims are full-extent blocks.
    w3 = w_pad.reshape(P, 1, H_pad)

    needed = (G * 2 * 8 * H_pad * wsize    # G row streams, dbl-buffered, sublane-padded
              + 2 * G * H_pad * wsize)     # output double buffer

    def _row_spec(g):
        # Data-dependent gather: the block row index comes from prefetched ids.
        return pl.BlockSpec((1, 1, H_pad),
                            lambda i, pid_ref, g=g: (pid_ref[i * G + g], 0, 0))

    out = pl.pallas_call(
        _gather_kernel,
        out_shape=jax.ShapeDtypeStruct((N_pad, H_pad), w_pad.dtype),
        grid_spec=pltpu.PrefetchScalarGridSpec(
            num_scalar_prefetch=1,
            grid=(N_pad // G,),
            in_specs=[_row_spec(g) for g in range(G)],
            out_specs=pl.BlockSpec((G, H_pad), lambda i, pid_ref: (i, 0)),
        ),
        compiler_params=pltpu.CompilerParams(
            dimension_semantics=("parallel",),
            vmem_limit_bytes=_derive_vmem_limit(needed),
        ),
    )(pid_flat, *([w3] * G))
    return out[:N]


# ---------------------------------------------------------------------------
# Public wrapper (forward pass of PositionEmbeddings, eval path).
# ---------------------------------------------------------------------------
def position_embeddings(position_ids, weight, *, tokens_per_block=256,
                        onehot_max_rows=512, gather_rows_per_step=16):
    """position_ids: (B, S) int; weight: (max_pos, hidden) -> (B, S, hidden)."""
    B, S = position_ids.shape
    P, H = weight.shape

    # Lane-dense output: pad hidden to a multiple of 128 (unmasked stores).
    H_pad = _round_up(H, 128)
    w_pad = weight if H_pad == H else jnp.pad(weight, ((0, 0), (0, H_pad - H)))

    pid_flat = position_ids.reshape(-1).astype(jnp.int32)

    table_bytes = P * H_pad * jnp.dtype(weight.dtype).itemsize
    use_onehot = (P <= onehot_max_rows) and (table_bytes <= (24 << 20))

    if use_onehot:
        out_flat = _onehot_lookup(pid_flat, w_pad,
                                  tokens_per_block=tokens_per_block)
    else:
        out_flat = _gather_lookup(pid_flat, w_pad,
                                  rows_per_step=gather_rows_per_step)

    if H_pad != H:
        out_flat = out_flat[:, :H]
    return out_flat.reshape(B, S, H)


if __name__ == "__main__":
    key = jax.random.PRNGKey(0)
    k_w, k_p, k_w2, k_p2 = jax.random.split(key, 4)

    # Small config consistent with the module: max_position_embeddings=16,
    # hidden_size=32, batch=2, sequence_length=8  ->  one-hot MXU path.
    P1, H1, B, S = 16, 32, 2, 8
    w1 = jax.random.normal(k_w, (P1, H1), dtype=jnp.float32)
    ids1 = jax.random.randint(k_p, (B, S), 0, P1, dtype=jnp.int32)
    out1 = jax.block_until_ready(position_embeddings(ids1, w1))
    np.testing.assert_allclose(np.asarray(out1), np.asarray(w1[ids1]),
                               rtol=1e-6, atol=1e-6)

    # Larger position table -> HBM row-gather path (scalar-prefetch index_map).
    P2, H2 = 1024, 32
    w2 = jax.random.normal(k_w2, (P2, H2), dtype=jnp.float32)
    ids2 = jax.random.randint(k_p2, (B, S), 0, P2, dtype=jnp.int32)
    out2 = jax.block_until_ready(position_embeddings(ids2, w2))
    np.testing.assert_allclose(np.asarray(out2), np.asarray(w2[ids2]),
                               rtol=1e-6, atol=1e-6)

    print("KERNEL_OK")
</pallas_src>

<mosaic_0001>
module attributes {stable_mosaic.version = 11 : i64} {
  func.func @_onehot_kernel(%arg0: i32, %arg1: memref<16x1xi32, #tpu.memory_space<vmem>>, %arg2: memref<16x128xf32, #tpu.memory_space<vmem>>, %arg3: memref<16x128xf32, #tpu.memory_space<vmem>>) attributes {dimension_semantics = [#tpu.dimension_semantics<parallel>], iteration_bounds = array<i64: 1>, scalar_prefetch = 0 : i64, scratch_operands = 0 : i64, tpu.core_type = #tpu.core_type<tc>, window_params = [{transform_indices = @transform_0, window_bounds = array<i64: 16, 1>}, {pipeline_mode = #tpu.pipeline_mode<synchronous>, transform_indices = @transform_1, window_bounds = array<i64: 16, 128>}, {transform_indices = @transform_2, window_bounds = array<i64: 16, 128>}]} {
    %c0 = arith.constant 0 : index
    %c0_0 = arith.constant 0 : index
    %0 = vector.load %arg1[%c0, %c0_0] : memref<16x1xi32, #tpu.memory_space<vmem>>, vector<16x1xi32>
    %1 = tpu.iota {dimensions = array<i32: 1>} : vector<16x16xi32>
    %2 = vector.broadcast %0 : vector<16x1xi32> to vector<16x16xi32>
    %3 = arith.cmpi eq, %2, %1 : vector<16x16xi32>
    %4 = arith.extui %3 : vector<16x16xi1> to vector<16x16xi32>
    %5 = arith.sitofp %4 : vector<16x16xi32> to vector<16x16xf32>
    %c0_1 = arith.constant 0 : index
    %c0_2 = arith.constant 0 : index
    %6 = vector.load %arg2[%c0_1, %c0_2] : memref<16x128xf32, #tpu.memory_space<vmem>>, vector<16x128xf32>
    %cst = arith.constant dense<0.000000e+00> : vector<16x128xf32>
    %7 = tpu.matmul %5, %6, %cst {dimension_numbers = #tpu.dot_dimension_numbers<[1], [0], [0], [1], [0, 0, 1, 1], [], []>} : vector<16x16xf32>, vector<16x128xf32>, vector<16x128xf32> -> vector<16x128xf32>
    %c0_3 = arith.constant 0 : index
    %c0_4 = arith.constant 0 : index
    %8 = vector.load %arg3[%c0_3, %c0_4] : memref<16x128xf32, #tpu.memory_space<vmem>>, vector<16x128xf32>
    tpu.vector_store %arg3[%c0_3, %c0_4], %7 {strides = array<i32>} : memref<16x128xf32, #tpu.memory_space<vmem>>, vector<16x128xf32>,
    return
  }
  func.func @transform_0(%arg0: i32) -> (i32, i32) {
    %c0_i32 = arith.constant 0 : i32
    %c0_i32_0 = arith.constant 0 : i32
    return %arg0, %c0_i32 : i32, i32
  }
  func.func @transform_1(%arg0: i32) -> (i32, i32) {
    %c0_i32 = arith.constant 0 : i32
    %c0_i32_0 = arith.constant 0 : i32
    %c0_i32_1 = arith.constant 0 : i32
    return %c0_i32, %c0_i32_0 : i32, i32
  }
  func.func @transform_2(%arg0: i32) -> (i32, i32) {
    %c0_i32 = arith.constant 0 : i32
    %c0_i32_0 = arith.constant 0 : i32
    return %arg0, %c0_i32 : i32, i32
  }
}

module attributes {stable_mosaic.version = 11 : i64} {
  func.func @_onehot_kernel(%arg0: i32, %arg1: memref<16x1xi32, #tpu.memory_space<vmem>>, %arg2: memref<16x128xf32, #tpu.memory_space<vmem>>, %arg3: memref<16x128xf32, #tpu.memory_space<vmem>>) attributes {dimension_semantics = [#tpu.dimension_semantics<parallel>], iteration_bounds = array<i64: 1>, scalar_prefetch = 0 : i64, scratch_operands = 0 : i64, tpu.core_type = #tpu.core_type<tc>, window_params = [{transform_indices = @transform_0, window_bounds = array<i64: 16, 1>}, {pipeline_mode = #tpu.pipeline_mode<synchronous>, transform_indices = @transform_1, window_bounds = array<i64: 16, 128>}, {transform_indices = @transform_2, window_bounds = array<i64: 16, 128>}]} {
    %c0 = arith.constant 0 : index
    %c0_0 = arith.constant 0 : index
    %0 = vector.load %arg1[%c0, %c0_0] : memref<16x1xi32, #tpu.memory_space<vmem>>, vector<16x1xi32>
    %1 = tpu.iota {dimensions = array<i32: 1>} : vector<16x16xi32>
    %2 = vector.broadcast %0 : vector<16x1xi32> to vector<16x16xi32>
    %3 = arith.cmpi eq, %2, %1 : vector<16x16xi32>
    %4 = arith.extui %3 : vector<16x16xi1> to vector<16x16xi32>
    %5 = arith.sitofp %4 : vector<16x16xi32> to vector<16x16xf32>
    %c0_1 = arith.constant 0 : index
    %c0_2 = arith.constant 0 : index
    %6 = vector.load %arg2[%c0_1, %c0_2] : memref<16x128xf32, #tpu.memory_space<vmem>>, vector<16x128xf32>
    %cst = arith.constant dense<0.000000e+00> : vector<16x128xf32>
    %7 = tpu.matmul %5, %6, %cst {dimension_numbers = #tpu.dot_dimension_numbers<[1], [0], [0], [1], [0, 0, 1, 1], [], []>} : vector<16x16xf32>, vector<16x128xf32>, vector<16x128xf32> -> vector<16x128xf32>
    %c0_3 = arith.constant 0 : index
    %c0_4 = arith.constant 0 : index
    %8 = vector.load %arg3[%c0_3, %c0_4] : memref<16x128xf32, #tpu.memory_space<vmem>>, vector<16x128xf32>
    tpu.vector_store %arg3[%c0_3, %c0_4], %7 {strides = array<i32>} : memref<16x128xf32, #tpu.memory_space<vmem>>, vector<16x128xf32>,
    return
  }
  func.func @transform_0(%arg0: i32) -> (i32, i32) {
    %c0_i32 = arith.constant 0 : i32
    %c0_i32_0 = arith.constant 0 : i32
    return %arg0, %c0_i32 : i32, i32
  }
  func.func @transform_1(%arg0: i32) -> (i32, i32) {
    %c0_i32 = arith.constant 0 : i32
    %c0_i32_0 = arith.constant 0 : i32
    %c0_i32_1 = arith.constant 0 : i32
    return %c0_i32, %c0_i32_0 : i32, i32
  }
  func.func @transform_2(%arg0: i32) -> (i32, i32) {
    %c0_i32 = arith.constant 0 : i32
    %c0_i32_0 = arith.constant 0 : i32
    return %arg0, %c0_i32 : i32, i32
  }
}

</mosaic_0001>

<llo_original>
// kernel: tpu_custom_call.1
$region0: #{tpu_custom_call.1}
  #allocation0 [shape = 'u32[]', space=smem, size = 0x4, offset = 0x4, fixed_abs, tag = 'smem constant byte address 0x4 - core index']
  #allocation1 [shape = 'u32[144,128]{1,0:T(1,128)}', space=vmem, size = 0x12000, scoped, tag = 'internal scratch']
  %s0 = inlined_call_operand.vmem [shape: s32[16,1], index: 0, kind: input, shape index: {}]
  %s1 = inlined_call_operand.vmem [shape: f32[16,128], index: 1, kind: input, shape index: {}]
  %s2 = inlined_call_operand.hbm [shape: f32[16,128], index: 2, kind: output, shape index: {}]
  %s3 = sld [smem:[#allocation0]]
  $region18: #{tpu_custom_call.1} parent=0
    _
  %s5 = ssub.s32 1, %s3
  %s6 = scalar_select 0, %s5, %s3
  $region1: #{tpu_custom_call.1} parent=0
    #allocation2 [shape = 'u8[8192]{0}', space=vmem, size = 0x2000, scoped, tag = 'output window, operand 0, single buffered']
    #allocation3 [shape = 's32[1]{0}', space=sflag, size = 0x4, scoped, tag = 'scoped memory for tpu_custom_call.1']
    %7 = vsyncpa [#allocation3], 0
    // Predicated region
    $region2: #{tpu_custom_call.1} parent=1 // pred_check
      _
    $region3: #{tpu_custom_call.1} parent=1 // pred_check_branch
      %9 = sbr.rel (0) target = $region5
    $region4: #{tpu_custom_call.1} parent=1 // pred_region
      _
    $region5: #{tpu_custom_call.1} parent=1 // pred_fallthru
      _
    // Predicated region
    $region6: #{tpu_custom_call.1} parent=1 // pred_check
      _
    $region7: #{tpu_custom_call.1} parent=1 // pred_check_branch
      %11 = sbr.rel (0) target = $region9
    $region8: #{tpu_custom_call.1} parent=1 // pred_region
      _
    $region9: #{tpu_custom_call.1} parent=1 // pred_fallthru
      _
    %v12 = vld [vmem:[%s0] sm:$0xff]
    %v13 = vld [vmem:[%s0 + $0x8] sm:$0xff]
    %v14 = vlaneseq
    %v15 = vand.u32 %v14, 127
    %16 = vset.pattern.permute.xlu0 0
    %17 = vperm.xlu0 %16, %v12
    %v18 = vpop.permute.xlu0 %17
    %19 = vset.pattern.permute.xlu0 0
    %20 = vperm.xlu0 %19, %v13
    %v21 = vpop.permute.xlu0 %20
    %vm22 = vcmp.eq.s32.totalorder %v18, %v15
    %vm23 = vcmp.eq.s32.totalorder %v21, %v15
    %v24 = vsel %vm22, 1, 0
    %v25 = vsel %vm23, 1, 0
    %v26 = vcvt.s32.f32 %v24
    %v27 = vcvt.s32.f32 %v25
    %v28 = vld [vmem:[%s1] sm:$0xff]
    %v29 = vld [vmem:[%s1 + $0x8] sm:$0xff]
    %vm30 = vcmask 130048
    %v32 = vsel %vm30, %v26, 0
    %v35 = vsel %vm30, %v27, 0
    %37 = vmatprep.subr.mxu0 0.0
    %38 = vmatpush1.msra.mxu0 %v28
    %39 = vmatprep.subr.mxu0 0.0
    %40 = vmatpush1.msra.mxu0 %v29
    %41 = vmatprep.subr.mxu0 0.0
    %42 = vmatpush1.msra.mxu0 0.0
    %43 = vmatprep.subr.mxu0 0.0
    %44 = vmatpush1.msra.mxu0 0.0
    %45 = vmatprep.subr.mxu0 0.0
    %46 = vmatpush1.msra.mxu0 0.0
    %47 = vmatprep.subr.mxu0 0.0
    %48 = vmatpush1.msra.mxu0 0.0
    %49 = vmatprep.subr.mxu0 0.0
    %50 = vmatpush1.msra.mxu0 0.0
    %51 = vmatprep.subr.mxu0 0.0
    %52 = vmatpush1.msra.mxu0 0.0
    %53 = vmatprep.subr.mxu0 0.0
    %54 = vmatpush1.msra.mxu0 0.0
    %55 = vmatprep.subr.mxu0 0.0
    %56 = vmatpush1.msra.mxu0 0.0
    %57 = vmatprep.subr.mxu0 0.0
    %58 = vmatpush1.msra.mxu0 0.0
    %59 = vmatprep.subr.mxu0 0.0
    %60 = vmatpush1.msra.mxu0 0.0
    %61 = vmatprep.subr.mxu0 0.0
    %62 = vmatpush1.msra.mxu0 0.0
    %63 = vmatprep.subr.mxu0 0.0
    %64 = vmatpush1.msra.mxu0 0.0
    %65 = vmatprep.subr.mxu0 0.0
    %66 = vmatpush1.msra.mxu0 0.0
    %67 = vmatprep.subr.mxu0 0.0
    %68 = vmatpush1.msra.mxu0 0.0
    %69 = vmatprep.subr.mxu0 0.0
    %70 = vmatpush1.msra.mxu0 0.0
    %71 = vmatprep.subr.mxu0 0.0
    %72 = vmatpush1.msra.mxu0 0.0
    %73 = vmatprep.subr.mxu0 0.0
    %74 = vmatpush1.msra.mxu0 0.0
    %75 = vmatprep.subr.mxu0 0.0
    %76 = vmatpush1.msra.mxu0 0.0
    %77 = vmatprep.subr.mxu0 0.0
    %78 = vmatpush1.msra.mxu0 0.0
    %79 = vmatprep.subr.mxu0 0.0
    %80 = vmatpush1.msra.mxu0 0.0
    %81 = vmatprep.subr.mxu0 0.0
    %82 = vmatpush1.msra.mxu0 0.0
    %83 = vmatprep.subr.mxu0 0.0
    %84 = vmatpush1.msra.mxu0 0.0
    %85 = vmatprep.subr.mxu0 0.0
    %86 = vmatpush1.msra.mxu0 0.0
    %87 = vmatprep.subr.mxu0 0.0
    %88 = vmatpush1.msra.mxu0 0.0
    %89 = vmatprep.subr.mxu0 0.0
    %90 = vmatpush1.msra.mxu0 0.0
    %91 = vmatprep.subr.mxu0 0.0
    %92 = vmatpush1.msra.mxu0 0.0
    %93 = vmatprep.subr.mxu0 0.0
    %94 = vmatpush1.msra.mxu0 0.0
    %95 = vmatprep.subr.mxu0 0.0
    %96 = vmatpush1.msra.mxu0 0.0
    %97 = vmatprep.subr.mxu0 0.0
    %98 = vmatpush1.msra.mxu0 0.0
    %99 = vmatprep.subr.mxu0 0.0
    %100 = vmatpush1.msra.mxu0 0.0
    %101 = vmatprep.mubr.f32.mxu0 0.0
    %102 = vmatmul.mubr.f32.gmra.mrb[0].mxu0 %v32
    %v103 = vpop.f32.mrb[0].mxu0
    %v104 = vadd.f32 0.0, %v103
    %v105 = vpop.f32.mrb[0].mxu0
    %106 = vmatprep.mubr.f32.mxu0 0.0
    %107 = vmatmul.mubr.f32.gmra.mrb[0].mxu0 %v35
    %v108 = vpop.f32.mrb[0].mxu0
    %v109 = vadd.f32 0.0, %v108
    %v110 = vpop.f32.mrb[0].mxu0
    %111 = vdwg.mxu0
    %112 = vst [vmem:[#allocation2] sm:$0xff] %v104
    %113 = vst [vmem:[#allocation2 + $0x8] sm:$0xff] %v109
    // Predicated region
    $region10: #{tpu_custom_call.1} parent=1 // pred_check
      _
    $region11: #{tpu_custom_call.1} parent=1 // pred_check_branch
      %115 = sbr.rel (0) target = $region13
    $region12: #{tpu_custom_call.1} parent=1 // pred_region
      %s117 = ssub.s32 256, 256
      %118 = vsyncadd [#allocation3], %s117
      %s119 = sshll.u32 [#allocation2], 4
      %s120 = int_to_ptr.vmem [resolvable:$true] %s119
      %125 = dma.vmem_to_hbm [thread:$0]  %s120, 256, %s2, [#allocation3], 128, 128, 8
    $region13: #{tpu_custom_call.1} parent=1 // pred_fallthru
      _
    // Predicated region
    $region14: #{tpu_custom_call.1} parent=1 // pred_check
      _
    $region15: #{tpu_custom_call.1} parent=1 // pred_check_branch
      %127 = sbr.rel (0) target = $region17
    $region16: #{tpu_custom_call.1} parent=1 // pred_region
      %128 = dma.done [#allocation3], 256
    $region17: #{tpu_custom_call.1} parent=1 // pred_fallthru
      _
    %129 = vsyncpa [#allocation3], 1

// kernel: tpu_custom_call.1
$region0: #{tpu_custom_call.1}
  #allocation0 [shape = 'u32[]', space=smem, size = 0x4, offset = 0x4, fixed_abs, tag = 'smem constant byte address 0x4 - core index']
  #allocation1 [shape = 'u32[144,128]{1,0:T(1,128)}', space=vmem, size = 0x12000, scoped, tag = 'internal scratch']
  %s0 = inlined_call_operand.vmem [shape: s32[16,1], index: 0, kind: input, shape index: {}]
  %s1 = inlined_call_operand.vmem [shape: f32[16,128], index: 1, kind: input, shape index: {}]
  %s2 = inlined_call_operand.hbm [shape: f32[16,128], index: 2, kind: output, shape index: {}]
  %s3 = sld [smem:[#allocation0]]
  $region18: #{tpu_custom_call.1} parent=0
    _
  %s5 = ssub.s32 1, %s3
  %s6 = scalar_select 0, %s5, %s3
  $region1: #{tpu_custom_call.1} parent=0
    #allocation2 [shape = 'u8[8192]{0}', space=vmem, size = 0x2000, scoped, tag = 'output window, operand 0, single buffered']
    #allocation3 [shape = 's32[1]{0}', space=sflag, size = 0x4, scoped, tag = 'scoped memory for tpu_custom_call.1']
    %7 = vsyncpa [#allocation3], 0
    // Predicated region
    $region2: #{tpu_custom_call.1} parent=1 // pred_check
      _
    $region3: #{tpu_custom_call.1} parent=1 // pred_check_branch
      %9 = sbr.rel (0) target = $region5
    $region4: #{tpu_custom_call.1} parent=1 // pred_region
      _
    $region5: #{tpu_custom_call.1} parent=1 // pred_fallthru
      _
    // Predicated region
    $region6: #{tpu_custom_call.1} parent=1 // pred_check
      _
    $region7: #{tpu_custom_call.1} parent=1 // pred_check_branch
      %11 = sbr.rel (0) target = $region9
    $region8: #{tpu_custom_call.1} parent=1 // pred_region
      _
    $region9: #{tpu_custom_call.1} parent=1 // pred_fallthru
      _
    %v12 = vld [vmem:[%s0] sm:$0xff]
    %v13 = vld [vmem:[%s0 + $0x8] sm:$0xff]
    %v14 = vlaneseq
    %v15 = vand.u32 %v14, 127
    %16 = vset.pattern.permute.xlu0 0
    %17 = vperm.xlu0 %16, %v12
    %v18 = vpop.permute.xlu0 %17
    %19 = vset.pattern.permute.xlu0 0
    %20 = vperm.xlu0 %19, %v13
    %v21 = vpop.permute.xlu0 %20
    %vm22 = vcmp.eq.s32.totalorder %v18, %v15
    %vm23 = vcmp.eq.s32.totalorder %v21, %v15
    %v24 = vsel %vm22, 1, 0
    %v25 = vsel %vm23, 1, 0
    %v26 = vcvt.s32.f32 %v24
    %v27 = vcvt.s32.f32 %v25
    %v28 = vld [vmem:[%s1] sm:$0xff]
    %v29 = vld [vmem:[%s1 + $0x8] sm:$0xff]
    %vm30 = vcmask 130048
    %v32 = vsel %vm30, %v26, 0
    %v35 = vsel %vm30, %v27, 0
    %37 = vmatprep.subr.mxu0 0.0
    %38 = vmatpush1.msra.mxu0 %v28
    %39 = vmatprep.subr.mxu0 0.0
    %40 = vmatpush1.msra.mxu0 %v29
    %41 = vmatprep.subr.mxu0 0.0
    %42 = vmatpush1.msra.mxu0 0.0
    %43 = vmatprep.subr.mxu0 0.0
    %44 = vmatpush1.msra.mxu0 0.0
    %45 = vmatprep.subr.mxu0 0.0
    %46 = vmatpush1.msra.mxu0 0.0
    %47 = vmatprep.subr.mxu0 0.0
    %48 = vmatpush1.msra.mxu0 0.0
    %49 = vmatprep.subr.mxu0 0.0
    %50 = vmatpush1.msra.mxu0 0.0
    %51 = vmatprep.subr.mxu0 0.0
    %52 = vmatpush1.msra.mxu0 0.0
    %53 = vmatprep.subr.mxu0 0.0
    %54 = vmatpush1.msra.mxu0 0.0
    %55 = vmatprep.subr.mxu0 0.0
    %56 = vmatpush1.msra.mxu0 0.0
    %57 = vmatprep.subr.mxu0 0.0
    %58 = vmatpush1.msra.mxu0 0.0
    %59 = vmatprep.subr.mxu0 0.0
    %60 = vmatpush1.msra.mxu0 0.0
    %61 = vmatprep.subr.mxu0 0.0
    %62 = vmatpush1.msra.mxu0 0.0
    %63 = vmatprep.subr.mxu0 0.0
    %64 = vmatpush1.msra.mxu0 0.0
    %65 = vmatprep.subr.mxu0 0.0
    %66 = vmatpush1.msra.mxu0 0.0
    %67 = vmatprep.subr.mxu0 0.0
    %68 = vmatpush1.msra.mxu0 0.0
    %69 = vmatprep.subr.mxu0 0.0
    %70 = vmatpush1.msra.mxu0 0.0
    %71 = vmatprep.subr.mxu0 0.0
    %72 = vmatpush1.msra.mxu0 0.0
    %73 = vmatprep.subr.mxu0 0.0
    %74 = vmatpush1.msra.mxu0 0.0
    %75 = vmatprep.subr.mxu0 0.0
    %76 = vmatpush1.msra.mxu0 0.0
    %77 = vmatprep.subr.mxu0 0.0
    %78 = vmatpush1.msra.mxu0 0.0
    %79 = vmatprep.subr.mxu0 0.0
    %80 = vmatpush1.msra.mxu0 0.0
    %81 = vmatprep.subr.mxu0 0.0
    %82 = vmatpush1.msra.mxu0 0.0
    %83 = vmatprep.subr.mxu0 0.0
    %84 = vmatpush1.msra.mxu0 0.0
    %85 = vmatprep.subr.mxu0 0.0
    %86 = vmatpush1.msra.mxu0 0.0
    %87 = vmatprep.subr.mxu0 0.0
    %88 = vmatpush1.msra.mxu0 0.0
    %89 = vmatprep.subr.mxu0 0.0
    %90 = vmatpush1.msra.mxu0 0.0
    %91 = vmatprep.subr.mxu0 0.0
    %92 = vmatpush1.msra.mxu0 0.0
    %93 = vmatprep.subr.mxu0 0.0
    %94 = vmatpush1.msra.mxu0 0.0
    %95 = vmatprep.subr.mxu0 0.0
    %96 = vmatpush1.msra.mxu0 0.0
    %97 = vmatprep.subr.mxu0 0.0
    %98 = vmatpush1.msra.mxu0 0.0
    %99 = vmatprep.subr.mxu0 0.0
    %100 = vmatpush1.msra.mxu0 0.0
    %101 = vmatprep.mubr.f32.mxu0 0.0
    %102 = vmatmul.mubr.f32.gmra.mrb[0].mxu0 %v32
    %v103 = vpop.f32.mrb[0].mxu0
    %v104 = vadd.f32 0.0, %v103
    %v105 = vpop.f32.mrb[0].mxu0
    %106 = vmatprep.mubr.f32.mxu0 0.0
    %107 = vmatmul.mubr.f32.gmra.mrb[0].mxu0 %v35
    %v108 = vpop.f32.mrb[0].mxu0
    %v109 = vadd.f32 0.0, %v108
    %v110 = vpop.f32.mrb[0].mxu0
    %111 = vdwg.mxu0
    %112 = vst [vmem:[#allocation2] sm:$0xff] %v104
    %113 = vst [vmem:[#allocation2 + $0x8] sm:$0xff] %v109
    // Predicated region
    $region10: #{tpu_custom_call.1} parent=1 // pred_check
      _
    $region11: #{tpu_custom_call.1} parent=1 // pred_check_branch
      %115 = sbr.rel (0) target = $region13
    $region12: #{tpu_custom_call.1} parent=1 // pred_region
      %s117 = ssub.s32 256, 256
      %118 = vsyncadd [#allocation3], %s117
      %s119 = sshll.u32 [#allocation2], 4
      %s120 = int_to_ptr.vmem [resolvable:$true] %s119
      %125 = dma.vmem_to_hbm [thread:$0]  %s120, 256, %s2, [#allocation3], 128, 128, 8
    $region13: #{tpu_custom_call.1} parent=1 // pred_fallthru
      _
    // Predicated region
    $region14: #{tpu_custom_call.1} parent=1 // pred_check
      _
    $region15: #{tpu_custom_call.1} parent=1 // pred_check_branch
      %127 = sbr.rel (0) target = $region17
    $region16: #{tpu_custom_call.1} parent=1 // pred_region
      %128 = dma.done [#allocation3], 256
    $region17: #{tpu_custom_call.1} parent=1 // pred_fallthru
      _
    %129 = vsyncpa [#allocation3], 1

</llo_original>
